<compile_context>
chip_gen: v6e
topology: v6e:2x2x1
jax: 0.10.0
libtpu: 0.0.40
codegen_flags: <defaults>
</compile_context>

<pallas_src>
import math

import jax
import jax.numpy as jnp
from jax.experimental import pallas as pl
from jax.experimental.pallas import tpu as pltpu


# ----------------------------------------------------------------------------
# Positional-encoding table (mirrors the PyTorch buffer construction exactly)
# ----------------------------------------------------------------------------
def make_positional_encoding_table(d_model, max_len=512, dtype=jnp.float32):
    position = jnp.arange(max_len, dtype=jnp.float32)[:, None]            # (max_len, 1)
    div_term = jnp.exp(jnp.arange(0, d_model, 2, dtype=jnp.float32)
                       * (-math.log(10000.0) / d_model))                  # (d_model/2,)
    pe = jnp.zeros((max_len, d_model), dtype=jnp.float32)
    pe = pe.at[:, 0::2].set(jnp.sin(position / div_term))                 # division, as in m4c.py
    pe = pe.at[:, 1::2].set(jnp.cos(position / div_term))
    return pe.astype(dtype)                                               # (max_len, d_model)


# ----------------------------------------------------------------------------
# Kernel: out = x + pe  (pe broadcast over the batch/sublane axis)
# ----------------------------------------------------------------------------
def _pe_add_kernel(x_ref, pe_ref, o_ref):
    # x_ref/o_ref: (bb, lt)   pe_ref: (1, lt)
    o_ref[...] = x_ref[...] + pe_ref[...]


# ----------------------------------------------------------------------------
# Wrapper
# ----------------------------------------------------------------------------
def positional_encoding_forward(x, pe_table):
    """x: (B, T, D); pe_table: (max_len, D). Returns x + pe[None, :T, :]."""
    B, T, D = x.shape
    max_len, d_model = pe_table.shape
    assert d_model == D and T <= max_len

    # Keep the activation dtype on the output (avoids doubling HBM write
    # bandwidth for bf16 activations); cast the small pe slice once here.
    out_dtype = x.dtype
    itemsize = jnp.dtype(out_dtype).itemsize

    # Flatten (T, D) -> L: dense 2-D blocks, wide lane axis, no size-1 sublane
    # dim. Elementwise correspondence between x and pe is preserved.
    L = T * D
    x2 = x.reshape(B, L)
    pe2 = pe_table[:T, :].reshape(1, L).astype(out_dtype)

    # ~6 MiB of x per grid step: amortizes the ~0.35 us/step pipeline overhead
    # and keeps the double-buffered working set (~4x block + pe) well under the
    # scoped-VMEM limits of v5e/v6e/v7x.
    target_bytes = 6 * 1024 * 1024

    # Lane tile: full L when an 8-row block still fits the target, otherwise
    # the largest 128-aligned chunk that does.
    lt_cap = max(128, ((target_bytes // (8 * itemsize)) // 128) * 128)
    lt = L if L <= lt_cap else lt_cap

    # Batch rows per block: multiple of 8 (sublane tile) or the full B.
    bb = max(1, target_bytes // (lt * itemsize))
    if bb >= B:
        bb = B
    else:
        bb = min(B, max(8, (bb // 8) * 8))

    # Grid: lane tiles outer, batch tiles innermost so the pe block index is
    # constant across consecutive steps and its DMA is skipped after the first.
    grid = (pl.cdiv(L, lt), pl.cdiv(B, bb))

    out2 = pl.pallas_call(
        _pe_add_kernel,
        out_shape=jax.ShapeDtypeStruct((B, L), out_dtype),
        grid_spec=pltpu.PrefetchScalarGridSpec(
            num_scalar_prefetch=0,
            grid=grid,
            in_specs=[
                pl.BlockSpec((bb, lt), lambda l, b: (b, l)),   # x
                pl.BlockSpec((1, lt), lambda l, b: (0, l)),    # pe (b-invariant)
            ],
            out_specs=pl.BlockSpec((bb, lt), lambda l, b: (b, l)),
        ),
        # x and the output have identical shape/dtype: donate x's buffer so no
        # second B*L HBM allocation is needed.
        input_output_aliases={0: 0},
        compiler_params=pltpu.CompilerParams(
            dimension_semantics=("parallel", "parallel"),
            vmem_limit_bytes=48 * 1024 * 1024,
        ),
    )(x2, pe2)

    return out2.reshape(B, T, D)


# ----------------------------------------------------------------------------
if __name__ == "__main__":
    d_model, max_len = 32, 512
    batch, seq_len = 2, 8

    key = jax.random.PRNGKey(0)
    x = jax.random.normal(key, (batch, seq_len, d_model), dtype=jnp.float32)

    pe_table = make_positional_encoding_table(d_model, max_len=max_len)

    # Pure-JAX reference (same math as the PyTorch forward), computed before
    # the kernel call since the kernel donates its input buffer.
    ref = x + pe_table[None, :seq_len, :]

    out = positional_encoding_forward(x, pe_table)
    out = jax.block_until_ready(out)

    assert out.shape == (batch, seq_len, d_model)
    assert bool(jnp.all(jnp.isfinite(out)))
    assert bool(jnp.allclose(out, ref, atol=1e-6, rtol=1e-6))
    print("KERNEL_OK")
</pallas_src>

<mosaic_0001>
module attributes {stable_mosaic.version = 11 : i64} {
  func.func @_pe_add_kernel(%arg0: i32, %arg1: i32, %arg2: memref<2x256xf32, #tpu.memory_space<vmem>>, %arg3: memref<1x256xf32, #tpu.memory_space<vmem>>, %arg4: memref<2x256xf32, #tpu.memory_space<vmem>>) attributes {dimension_semantics = [#tpu.dimension_semantics<parallel>, #tpu.dimension_semantics<parallel>], iteration_bounds = array<i64: 1, 1>, scalar_prefetch = 0 : i64, scratch_operands = 0 : i64, tpu.core_type = #tpu.core_type<tc>, window_params = [{transform_indices = @transform_0, window_bounds = array<i64: 2, 256>}, {transform_indices = @transform_1, window_bounds = array<i64: 1, 256>}, {transform_indices = @transform_2, window_bounds = array<i64: 2, 256>}]} {
    %c0 = arith.constant 0 : index
    %c0_0 = arith.constant 0 : index
    %0 = vector.load %arg2[%c0, %c0_0] : memref<2x256xf32, #tpu.memory_space<vmem>>, vector<2x256xf32>
    %c0_1 = arith.constant 0 : index
    %c0_2 = arith.constant 0 : index
    %1 = vector.load %arg3[%c0_1, %c0_2] : memref<1x256xf32, #tpu.memory_space<vmem>>, vector<1x256xf32>
    %2 = vector.broadcast %1 : vector<1x256xf32> to vector<2x256xf32>
    %3 = arith.addf %0, %2 : vector<2x256xf32>
    %c0_3 = arith.constant 0 : index
    %c0_4 = arith.constant 0 : index
    %4 = vector.load %arg4[%c0_3, %c0_4] : memref<2x256xf32, #tpu.memory_space<vmem>>, vector<2x256xf32>
    tpu.vector_store %arg4[%c0_3, %c0_4], %3 {strides = array<i32>} : memref<2x256xf32, #tpu.memory_space<vmem>>, vector<2x256xf32>,
    return
  }
  func.func @transform_0(%arg0: i32, %arg1: i32) -> (i32, i32) {
    %c0_i32 = arith.constant 0 : i32
    return %arg1, %arg0 : i32, i32
  }
  func.func @transform_1(%arg0: i32, %arg1: i32) -> (i32, i32) {
    %c0_i32 = arith.constant 0 : i32
    %c0_i32_0 = arith.constant 0 : i32
    return %c0_i32, %arg0 : i32, i32
  }
  func.func @transform_2(%arg0: i32, %arg1: i32) -> (i32, i32) {
    %c0_i32 = arith.constant 0 : i32
    return %arg1, %arg0 : i32, i32
  }
}

</mosaic_0001>

<llo_original>
// kernel: tpu_custom_call.1
$region0: #{tpu_custom_call.1}
  #allocation0 [shape = 'u32[]', space=smem, size = 0x4, offset = 0x4, fixed_abs, tag = 'smem constant byte address 0x4 - core index']
  #allocation1 [shape = 'u32[144,128]{1,0:T(1,128)}', space=vmem, size = 0x12000, scoped, tag = 'internal scratch']
  %s0 = inlined_call_operand.hbm [shape: f32[2,256], index: 0, kind: input, shape index: {}, may-alias: {0,2}]
  %s1 = inlined_call_operand.vmem [shape: f32[1,256], index: 1, kind: input, shape index: {}]
  %s2 = inlined_call_operand.hbm [shape: f32[2,256], index: 2, kind: output, shape index: {}, may-alias: {0,2}]
  %s3 = sld [smem:[#allocation0]]
  $region22: #{tpu_custom_call.1} parent=0
    _
  %s5 = ssub.s32 1, %s3
  %s6 = scalar_select 0, %s5, %s3
  $region1: #{tpu_custom_call.1} parent=0
    #allocation2 [shape = 'u8[2048]{0}', space=vmem, size = 0x800, scoped, tag = 'input window, operand 0, single buffered']
    #allocation3 [shape = 's32[1]{0}', space=sflag, size = 0x4, scoped, tag = 'scoped memory for tpu_custom_call.1']
    #allocation4 [shape = 's32[1]{0}', space=sflag, size = 0x4, scoped, tag = 'scoped memory for tpu_custom_call.1']
    #allocation5 [shape = 'u8[2048]{0}', space=vmem, size = 0x800, scoped, tag = 'output window, operand 0, single buffered']
    %7 = vsyncpa [#allocation3], 0
    %8 = vsyncpa [#allocation4], 0
    // Predicated region
    $region2: #{tpu_custom_call.1} parent=1 // pred_check
      _
    $region3: #{tpu_custom_call.1} parent=1 // pred_check_branch
      %10 = sbr.rel (0) target = $region5
    $region4: #{tpu_custom_call.1} parent=1 // pred_region
      %s12 = ssub.s32 64, 64
      %13 = vsyncadd [#allocation3], %s12
      %s15 = sshll.u32 [#allocation2], 4
      %s16 = int_to_ptr.vmem [resolvable:$true] %s15
      %18 = dma.hbm_to_vmem [thread:$0]  %s0, 64, %s16, [#allocation3]
    $region5: #{tpu_custom_call.1} parent=1 // pred_fallthru
      _
    // Predicated region
    $region6: #{tpu_custom_call.1} parent=1 // pred_check
      _
    $region7: #{tpu_custom_call.1} parent=1 // pred_check_branch
      %20 = sbr.rel (0) target = $region9
    $region8: #{tpu_custom_call.1} parent=1 // pred_region
      _
    $region9: #{tpu_custom_call.1} parent=1 // pred_fallthru
      _
    // Predicated region
    $region10: #{tpu_custom_call.1} parent=1 // pred_check
      _
    $region11: #{tpu_custom_call.1} parent=1 // pred_check_branch
      %22 = sbr.rel (0) target = $region13
    $region12: #{tpu_custom_call.1} parent=1 // pred_region
      %23 = dma.done [#allocation3], 64
    $region13: #{tpu_custom_call.1} parent=1 // pred_fallthru
      _
    %v24 = vld [vmem:[#allocation2] sm:$0xf]
    %v25 = vld [vmem:[%s1] sm:$0x3]
    %v27 = vlaneseq
    %v28 = vshrl.u32 %v27, 7
    %v29 = vsub.s32 0, %v28
    %v30 = vrot.slane %v25, %v29
    %v31 = vlaneseq
    %v32 = vshrl.u32 %v31, 7
    %v33 = vsub.s32 1, %v32
    %v34 = vrot.slane %v25, %v33
    %v35 = vcombine.low %v30, %v34
    %v37 = vunpack.c.l.s4 1983009808
    %v38 = vunpack.c.0.s8 %v37
    %v39 = vlaneseq
    %v40 = vshrl.u32 %v39, 7
    %v41 = vsub.s32 %v38, %v40
    %v42 = vrot.slane %v35, %v41
    %v44 = vadd.f32 %v24, %v42
    %45 = vst [vmem:[#allocation5] sm:$0xf] %v44
    // Predicated region
    $region14: #{tpu_custom_call.1} parent=1 // pred_check
      _
    $region15: #{tpu_custom_call.1} parent=1 // pred_check_branch
      %47 = sbr.rel (0) target = $region17
    $region16: #{tpu_custom_call.1} parent=1 // pred_region
      %s49 = ssub.s32 64, 64
      %50 = vsyncadd [#allocation4], %s49
      %s52 = sshll.u32 [#allocation5], 4
      %s53 = int_to_ptr.vmem [resolvable:$true] %s52
      %55 = dma.vmem_to_hbm [thread:$0]  %s53, 64, %s2, [#allocation4]
    $region17: #{tpu_custom_call.1} parent=1 // pred_fallthru
      _
    // Predicated region
    $region18: #{tpu_custom_call.1} parent=1 // pred_check
      _
    $region19: #{tpu_custom_call.1} parent=1 // pred_check_branch
      %57 = sbr.rel (0) target = $region21
    $region20: #{tpu_custom_call.1} parent=1 // pred_region
      %58 = dma.done [#allocation4], 64
    $region21: #{tpu_custom_call.1} parent=1 // pred_fallthru
      _
    %59 = vsyncpa [#allocation3], 1
    %60 = vsyncpa [#allocation4], 1

</llo_original>
